<compile_context>
chip_gen: v5e
topology: v5e:2x2
jax: 0.10.0
libtpu: 0.0.40
codegen_flags: <defaults>
</compile_context>

<pallas_src>
import functools

import jax
import jax.numpy as jnp
import numpy as np
from jax.experimental import pallas as pl
from jax.experimental.pallas import tpu as pltpu


def _identity_forward_kernel(x_ref, o_ref):
    # Empty nn.Sequential() == identity: pass the tile through VMEM.
    o_ref[...] = x_ref[...]


def _choose_tile_rows(n: int, f: int, itemsize: int) -> int:
    """Rows per tile: ~4 MiB per block so the double-buffered in+out pipeline
    stays well under the default scoped-VMEM limit on every chip generation."""
    target_bytes = 4 * 1024 * 1024
    tn = target_bytes // max(1, f * itemsize)
    tn = max(8, (tn // 8) * 8)          # sublane multiple of 8
    if tn >= n:
        return n                        # single full-extent block (always legal)
    return tn


@functools.partial(jax.jit, static_argnums=(1,), donate_argnums=(0,))
def _identity_pallas(x, tile_rows):
    n, f = x.shape
    grid = (pl.cdiv(n, tile_rows),)
    return pl.pallas_call(
        _identity_forward_kernel,
        out_shape=jax.ShapeDtypeStruct((n, f), x.dtype),
        grid=grid,
        in_specs=[pl.BlockSpec((tile_rows, f), lambda i: (i, 0))],
        out_specs=pl.BlockSpec((tile_rows, f), lambda i: (i, 0)),
        # Output aliases the (donated) input buffer: no new HBM allocation.
        input_output_aliases={0: 0},
        compiler_params=pltpu.CompilerParams(
            dimension_semantics=("parallel",),   # shard tiles across v7x's 2 TCs
        ),
    )(x)


def neural_network_forward(x: jax.Array, *, tile_rows=None,
                           use_pallas: bool = True) -> jax.Array:
    """Pallas equivalent of NeuralNetwork.forward (empty Sequential == identity).

    Args:
        x: (data_number, features_number) array.  NOTE: the input buffer is
           donated (aliased to the output); do not reuse `x` on device after
           this call.
        tile_rows: optional override for rows-per-tile (rounded to a multiple
           of 8 when smaller than the batch).
        use_pallas: if False, skip the kernel entirely and return x (the
           truly-free path for the identity module).

    Returns:
        (data_number, features_number) array equal to x.
    """
    if not use_pallas:
        return x
    n, f = x.shape
    if tile_rows is None:
        tile_rows = _choose_tile_rows(n, f, jnp.dtype(x.dtype).itemsize)
    if tile_rows >= n:
        tile_rows = n
    else:
        tile_rows = max(8, (tile_rows // 8) * 8)
    return _identity_pallas(x, int(tile_rows))


if __name__ == "__main__":
    key = jax.random.PRNGKey(0)
    k1, k2 = jax.random.split(key)

    # Case 1: module defaults — inputs=1023 features, small batch of 2.
    batch, inputs = 2, 1023
    x1 = jax.random.normal(k1, (batch, inputs), dtype=jnp.float32)
    expected1 = np.asarray(jax.device_get(x1))   # host snapshot before donation
    y1 = jax.block_until_ready(neural_network_forward(x1))
    assert y1.shape == (batch, inputs), y1.shape
    assert y1.dtype == x1.dtype
    assert np.array_equal(np.asarray(jax.device_get(y1)), expected1), \
        "identity forward mismatch (case 1)"

    # Case 2: exercise the tiled grid path (multiple blocks + a partial
    # remainder block): 20 rows with tile_rows=8 -> grid of 3.
    x2 = jax.random.normal(k2, (20, inputs), dtype=jnp.float32)
    expected2 = np.asarray(jax.device_get(x2))
    y2 = jax.block_until_ready(neural_network_forward(x2, tile_rows=8))
    assert y2.shape == (20, inputs)
    assert y2.dtype == x2.dtype
    assert np.array_equal(np.asarray(jax.device_get(y2)), expected2), \
        "identity forward mismatch (case 2, tiled)"

    print("KERNEL_OK")
</pallas_src>

<mosaic_0001>
module attributes {stable_mosaic.version = 11 : i64} {
  func.func @_identity_forward_kernel(%arg0: i32, %arg1: memref<2x1023xf32, #tpu.memory_space<vmem>>, %arg2: memref<2x1023xf32, #tpu.memory_space<vmem>>) attributes {dimension_semantics = [#tpu.dimension_semantics<parallel>], iteration_bounds = array<i64: 1>, scalar_prefetch = 0 : i64, scratch_operands = 0 : i64, tpu.core_type = #tpu.core_type<tc>, window_params = [{transform_indices = @transform_0, window_bounds = array<i64: 2, 1023>}, {transform_indices = @transform_1, window_bounds = array<i64: 2, 1023>}]} {
    %c0 = arith.constant 0 : index
    %c0_0 = arith.constant 0 : index
    %0 = vector.load %arg1[%c0, %c0_0] : memref<2x1023xf32, #tpu.memory_space<vmem>>, vector<2x1023xf32>
    %c0_1 = arith.constant 0 : index
    %c0_2 = arith.constant 0 : index
    %1 = vector.load %arg2[%c0_1, %c0_2] : memref<2x1023xf32, #tpu.memory_space<vmem>>, vector<2x1023xf32>
    tpu.vector_store %arg2[%c0_1, %c0_2], %0 {strides = array<i32>} : memref<2x1023xf32, #tpu.memory_space<vmem>>, vector<2x1023xf32>,
    return
  }
  func.func @transform_0(%arg0: i32) -> (i32, i32) {
    %c0_i32 = arith.constant 0 : i32
    %c0_i32_0 = arith.constant 0 : i32
    return %arg0, %c0_i32 : i32, i32
  }
  func.func @transform_1(%arg0: i32) -> (i32, i32) {
    %c0_i32 = arith.constant 0 : i32
    %c0_i32_0 = arith.constant 0 : i32
    return %arg0, %c0_i32 : i32, i32
  }
}

</mosaic_0001>

<llo_original>
// kernel: _identity_pallas.1
$region0: #{_identity_pallas.1}
  #allocation0 [shape = 'u32[]', space=smem, size = 0x4, offset = 0x4, fixed_abs, tag = 'smem constant byte address 0x4 - core index']
  #allocation1 [shape = 'u32[72,128]{1,0:T(1,128)}', space=vmem, size = 0x9000, scoped, tag = 'internal scratch']
  %s0 = inlined_call_operand.hbm [shape: f32[2,1023], index: 0, kind: input, shape index: {}, may-alias: {0,1}]
  %s1 = inlined_call_operand.hbm [shape: f32[2,1023], index: 1, kind: output, shape index: {}, may-alias: {0,1}]
  %s2 = sld [smem:[#allocation0]]
  $region18: #{_identity_pallas.1} parent=0
    _
  %s4 = ssub.s32 1, %s2
  %s5 = scalar_select 0, %s4, %s2
  $region1: #{_identity_pallas.1} parent=0
    #allocation2 [shape = 'u8[8192]{0}', space=vmem, size = 0x2000, scoped, tag = 'input window, operand 0, single buffered']
    #allocation3 [shape = 's32[1]{0}', space=sflag, size = 0x4, scoped, tag = 'scoped memory for _identity_pallas.1']
    #allocation4 [shape = 's32[1]{0}', space=sflag, size = 0x4, scoped, tag = 'scoped memory for _identity_pallas.1']
    #allocation5 [shape = 'u8[8192]{0}', space=vmem, size = 0x2000, scoped, tag = 'output window, operand 0, single buffered']
    %6 = vsyncpa [#allocation3], 0
    %7 = vsyncpa [#allocation4], 0
    // Predicated region
    $region2: #{_identity_pallas.1} parent=1 // pred_check
      _
    $region3: #{_identity_pallas.1} parent=1 // pred_check_branch
      %9 = sbr.rel (0) target = $region5
    $region4: #{_identity_pallas.1} parent=1 // pred_region
      %11 = vsyncadd [#allocation3], 0
      %s13 = sshll.u32 %s0, 4
      %s14 = int_to_ptr.hbm [resolvable:$true] %s13
      %s15 = sshll.u32 [#allocation2], 4
      %s16 = int_to_ptr.vmem [resolvable:$true] %s15
      %18 = dma.hbm_to_vmem [thread:$0]  %s14, 256, %s16, [#allocation3]
    $region5: #{_identity_pallas.1} parent=1 // pred_fallthru
      _
    // Predicated region
    $region6: #{_identity_pallas.1} parent=1 // pred_check
      _
    $region7: #{_identity_pallas.1} parent=1 // pred_check_branch
      %20 = sbr.rel (0) target = $region9
    $region8: #{_identity_pallas.1} parent=1 // pred_region
      %22 = dma.done [#allocation3], 256
    $region9: #{_identity_pallas.1} parent=1 // pred_fallthru
      _
    %v23 = vld [vmem:[#allocation2] sm:$0xff]
    %v24 = vld [vmem:[#allocation2 + $0x8] sm:$0xff]
    %25 = vst [vmem:[#allocation5] sm:$0xff] %v23
    %vm26 = vcmask 1041408
    %vm27 = vcmask 1043458
    %vm28 = vmor %vm27, %vm26
    %vm29 = vcmask 1045508
    %vm30 = vmor %vm29, %vm28
    %vm31 = vcmask 1039366
    %vm32 = vmor %vm31, %vm30
    %33 = vst.msk [vmem:[#allocation5 + $0x8] sm:$0xff] %vm32, %v24
    // Predicated region
    $region10: #{_identity_pallas.1} parent=1 // pred_check
      _
    $region11: #{_identity_pallas.1} parent=1 // pred_check_branch
      %35 = sbr.rel (0) target = $region13
    $region12: #{_identity_pallas.1} parent=1 // pred_region
      %37 = vsyncadd [#allocation4], 0
      %s39 = sshll.u32 [#allocation5], 4
      %s40 = int_to_ptr.vmem [resolvable:$true] %s39
      %s41 = sshll.u32 %s1, 4
      %s42 = int_to_ptr.hbm [resolvable:$true] %s41
      %44 = dma.vmem_to_hbm [thread:$0]  %s40, 256, %s42, [#allocation4]
    $region13: #{_identity_pallas.1} parent=1 // pred_fallthru
      _
    // Predicated region
    $region14: #{_identity_pallas.1} parent=1 // pred_check
      _
    $region15: #{_identity_pallas.1} parent=1 // pred_check_branch
      %46 = sbr.rel (0) target = $region17
    $region16: #{_identity_pallas.1} parent=1 // pred_region
      %48 = dma.done [#allocation4], 256
    $region17: #{_identity_pallas.1} parent=1 // pred_fallthru
      _
    %49 = vsyncpa [#allocation3], 1
    %50 = vsyncpa [#allocation4], 1

</llo_original>
